<compile_context>
chip_gen: v5e
topology: v5e:2x2
jax: 0.10.0
libtpu: 0.0.40
codegen_flags: <defaults>
</compile_context>

<pallas_src>
import jax
import jax.numpy as jnp
import numpy as np
from jax.experimental import pallas as pl
from jax.experimental.pallas import tpu as pltpu


# --------------------------------------------------------------------------
# Pallas kernel: fused whole-array HBM->HBM DMA copy for N leaves.
# refs layout: (in_0..in_{n-1}, out_0..out_{n-1}, sem[(n,)])
# --------------------------------------------------------------------------
def _fused_dma_copy_kernel(*refs):
    n = (len(refs) - 1) // 2
    in_refs = refs[:n]
    out_refs = refs[n:2 * n]
    sem = refs[2 * n]
    copies = [
        pltpu.make_async_copy(in_refs[i], out_refs[i], sem.at[i])
        for i in range(n)
    ]
    for cp in copies:   # issue all DMAs first so they overlap
        cp.start()
    for cp in copies:
        cp.wait()


def _is_array_leaf(leaf):
    return isinstance(leaf, (jax.Array, np.ndarray))


def _materialized_tree_copy(x):
    """Copy every array leaf of a pytree in a single fused pallas_call."""
    leaves, treedef = jax.tree_util.tree_flatten(x)
    arr_idx = [i for i, leaf in enumerate(leaves) if _is_array_leaf(leaf)]
    if not arr_idx:
        return x

    arrs, orig_shapes = [], []
    for i in arr_idx:
        a = jnp.asarray(leaves[i])
        orig_shapes.append(a.shape)
        # 0-d leaves get a trivial 2-D view for the DMA; shape restored below.
        arrs.append(a.reshape(1, 1) if a.ndim == 0 else a)

    n = len(arrs)
    total_bytes = sum(a.size * a.dtype.itemsize for a in arrs)

    outs = pl.pallas_call(
        _fused_dma_copy_kernel,
        out_shape=tuple(jax.ShapeDtypeStruct(a.shape, a.dtype) for a in arrs),
        in_specs=[pl.BlockSpec(memory_space=pl.ANY)] * n,
        out_specs=tuple(pl.BlockSpec(memory_space=pl.ANY) for _ in range(n)),
        scratch_shapes=[pltpu.SemaphoreType.DMA((n,))],
        cost_estimate=pl.CostEstimate(
            flops=0, transcendentals=0, bytes_accessed=2 * total_bytes),
    )(*arrs)
    if not isinstance(outs, (tuple, list)):
        outs = (outs,)

    new_leaves = list(leaves)
    for j, i in enumerate(arr_idx):
        new_leaves[i] = outs[j].reshape(orig_shapes[j])
    return jax.tree_util.tree_unflatten(treedef, new_leaves)


def noop_copy(x, *, materialize_copy=False):
    """Identity on a single array/pytree.  Copies only if explicitly asked."""
    if not materialize_copy:
        return x
    return _materialized_tree_copy(x)


# --------------------------------------------------------------------------
# NoopEncoder wrapper: forward(x) -> x.
# --------------------------------------------------------------------------
class NoopEncoder:
    def __init__(self, materialize_copy=False, **_kwargs):
        self._materialize_copy = materialize_copy

    def __call__(self, x):
        if not self._materialize_copy:
            # Fast path: the module is the identity; JAX arrays are immutable,
            # so returning x unchanged is already value-correct and costs
            # nothing (0 HBM bytes, 0 kernel launches).
            return x
        return _materialized_tree_copy(x)


if __name__ == "__main__":
    key = jax.random.PRNGKey(0)
    k1, k2, k3 = jax.random.split(key, 3)

    batch, seq = 2, 8
    x = {
        "eef_pos": jax.random.normal(k1, (batch, seq, 7), jnp.float32),
        "gripper": jax.random.normal(k2, (batch, seq, 9), jnp.float32),
        "cam_feat": jax.random.normal(k3, (batch, seq, 64), jnp.float32),
        "timestep": 5,   # non-array leaf: must pass through untouched
    }

    # Default (and recommended) path: pure identity, no kernel launched.
    enc = NoopEncoder(state_shape=None, excluded_keys=())
    out = enc(x)
    assert out is x  # zero-cost identity

    # Optional materialized-copy path: one fused HBM->HBM DMA pallas_call.
    enc_copy = NoopEncoder(materialize_copy=True)
    out_copy = enc_copy(x)
    out_copy = jax.block_until_ready(out_copy)

    assert set(out_copy.keys()) == set(x.keys())
    for k, v in x.items():
        if isinstance(v, jax.Array):
            assert out_copy[k].shape == v.shape, (k, out_copy[k].shape)
            assert out_copy[k].dtype == v.dtype, (k, out_copy[k].dtype)
            assert out_copy[k] is not v, k                       # fresh buffer
            assert bool(jnp.array_equal(out_copy[k], v)), k      # bit-exact
        else:
            assert out_copy[k] == v, k                           # passthrough

    print("KERNEL_OK")
</pallas_src>

<mosaic_0001>
module attributes {stable_mosaic.version = 11 : i64} {
  func.func @_fused_dma_copy_kernel(%arg0: memref<2x8x64xf32, #tpu.memory_space<any>>, %arg1: memref<2x8x7xf32, #tpu.memory_space<any>>, %arg2: memref<2x8x9xf32, #tpu.memory_space<any>>, %arg3: memref<2x8x64xf32, #tpu.memory_space<any>>, %arg4: memref<2x8x7xf32, #tpu.memory_space<any>>, %arg5: memref<2x8x9xf32, #tpu.memory_space<any>>, %arg6: memref<3x!tpu.dma_semaphore, #tpu.memory_space<semaphore_mem>>) attributes {dimension_semantics = [], scalar_prefetch = 0 : i64, scratch_operands = 1 : i64, tpu.core_type = #tpu.core_type<tc>} {
    %c0_i32 = arith.constant 0 : i32
    %0 = tpu.memref_slice %arg6[%c0_i32] : memref<3x!tpu.dma_semaphore, #tpu.memory_space<semaphore_mem>> -> memref<1x!tpu.dma_semaphore, #tpu.memory_space<semaphore_mem>>
    %1 = tpu.memref_squeeze %0 : memref<1x!tpu.dma_semaphore, #tpu.memory_space<semaphore_mem>> -> memref<!tpu.dma_semaphore, #tpu.memory_space<semaphore_mem>>
    tpu.enqueue_dma source(%arg0 : memref<2x8x64xf32, #tpu.memory_space<any>>) target(%arg3 : memref<2x8x64xf32, #tpu.memory_space<any>>) target_semaphore(%1 : memref<!tpu.dma_semaphore, #tpu.memory_space<semaphore_mem>>)
    %c1_i32 = arith.constant 1 : i32
    %2 = tpu.memref_slice %arg6[%c1_i32] : memref<3x!tpu.dma_semaphore, #tpu.memory_space<semaphore_mem>> -> memref<1x!tpu.dma_semaphore, #tpu.memory_space<semaphore_mem>>
    %3 = tpu.memref_squeeze %2 : memref<1x!tpu.dma_semaphore, #tpu.memory_space<semaphore_mem>> -> memref<!tpu.dma_semaphore, #tpu.memory_space<semaphore_mem>>
    tpu.enqueue_dma source(%arg1 : memref<2x8x7xf32, #tpu.memory_space<any>>) target(%arg4 : memref<2x8x7xf32, #tpu.memory_space<any>>) target_semaphore(%3 : memref<!tpu.dma_semaphore, #tpu.memory_space<semaphore_mem>>)
    %c2_i32 = arith.constant 2 : i32
    %4 = tpu.memref_slice %arg6[%c2_i32] : memref<3x!tpu.dma_semaphore, #tpu.memory_space<semaphore_mem>> -> memref<1x!tpu.dma_semaphore, #tpu.memory_space<semaphore_mem>>
    %5 = tpu.memref_squeeze %4 : memref<1x!tpu.dma_semaphore, #tpu.memory_space<semaphore_mem>> -> memref<!tpu.dma_semaphore, #tpu.memory_space<semaphore_mem>>
    tpu.enqueue_dma source(%arg2 : memref<2x8x9xf32, #tpu.memory_space<any>>) target(%arg5 : memref<2x8x9xf32, #tpu.memory_space<any>>) target_semaphore(%5 : memref<!tpu.dma_semaphore, #tpu.memory_space<semaphore_mem>>)
    %c0_i32_0 = arith.constant 0 : i32
    %6 = tpu.memref_slice %arg6[%c0_i32_0] : memref<3x!tpu.dma_semaphore, #tpu.memory_space<semaphore_mem>> -> memref<1x!tpu.dma_semaphore, #tpu.memory_space<semaphore_mem>>
    %7 = tpu.memref_squeeze %6 : memref<1x!tpu.dma_semaphore, #tpu.memory_space<semaphore_mem>> -> memref<!tpu.dma_semaphore, #tpu.memory_space<semaphore_mem>>
    tpu.wait_dma2 semaphore(%7 : memref<!tpu.dma_semaphore, #tpu.memory_space<semaphore_mem>>) src(%arg0 : memref<2x8x64xf32, #tpu.memory_space<any>>) dst(%arg3 : memref<2x8x64xf32, #tpu.memory_space<any>>)
    %c1_i32_1 = arith.constant 1 : i32
    %8 = tpu.memref_slice %arg6[%c1_i32_1] : memref<3x!tpu.dma_semaphore, #tpu.memory_space<semaphore_mem>> -> memref<1x!tpu.dma_semaphore, #tpu.memory_space<semaphore_mem>>
    %9 = tpu.memref_squeeze %8 : memref<1x!tpu.dma_semaphore, #tpu.memory_space<semaphore_mem>> -> memref<!tpu.dma_semaphore, #tpu.memory_space<semaphore_mem>>
    tpu.wait_dma2 semaphore(%9 : memref<!tpu.dma_semaphore, #tpu.memory_space<semaphore_mem>>) src(%arg1 : memref<2x8x7xf32, #tpu.memory_space<any>>) dst(%arg4 : memref<2x8x7xf32, #tpu.memory_space<any>>)
    %c2_i32_2 = arith.constant 2 : i32
    %10 = tpu.memref_slice %arg6[%c2_i32_2] : memref<3x!tpu.dma_semaphore, #tpu.memory_space<semaphore_mem>> -> memref<1x!tpu.dma_semaphore, #tpu.memory_space<semaphore_mem>>
    %11 = tpu.memref_squeeze %10 : memref<1x!tpu.dma_semaphore, #tpu.memory_space<semaphore_mem>> -> memref<!tpu.dma_semaphore, #tpu.memory_space<semaphore_mem>>
    tpu.wait_dma2 semaphore(%11 : memref<!tpu.dma_semaphore, #tpu.memory_space<semaphore_mem>>) src(%arg2 : memref<2x8x9xf32, #tpu.memory_space<any>>) dst(%arg5 : memref<2x8x9xf32, #tpu.memory_space<any>>)
    return
  }
}

</mosaic_0001>

<llo_original>
// kernel: tpu_custom_call.1
$region0: #{tpu_custom_call.1}
  #allocation0 [shape = 'u32[]', space=smem, size = 0x4, offset = 0x4, fixed_abs, tag = 'smem constant byte address 0x4 - core index']
  #allocation1 [shape = 'u32[72,128]{1,0:T(1,128)}', space=vmem, size = 0x9000, scoped, tag = 'internal scratch']
  #allocation2 [shape = 's32[3]{0}', space=sflag, size = 0xc, scoped, tag = 'scratch operand']
  #allocation3 [shape = 's32[]', space=sflag, size = 0x4, offset = 0, fixed_abs, tag = 'sflag constant byte address 0x0 - dummy sync flag']
  #allocation4 [shape = 's32[]', space=sflag, size = 0x4, offset = 0, fixed_abs, tag = 'sflag constant byte address 0x0 - dummy sync flag']
  #allocation5 [shape = 'u32[]', space=smem, size = 0x4, offset = 0x44, fixed_abs, tag = 'smem constant byte address 0x44 - assertion arg 0']
  #allocation6 [shape = 'u32[]', space=smem, size = 0x4, offset = 0x48, fixed_abs, tag = 'smem constant byte address 0x48 - assertion arg 1']
  #allocation7 [shape = 's32[]', space=sflag, size = 0x4, offset = 0, fixed_abs, tag = 'sflag constant byte address 0x0 - dummy sync flag']
  #allocation8 [shape = 's32[]', space=sflag, size = 0x4, offset = 0, fixed_abs, tag = 'sflag constant byte address 0x0 - dummy sync flag']
  #allocation9 [shape = 'u32[0]{0}', space=smem, size = 0, offset = 0, fixed_abs, tag = 'smem constant byte address 0x0 - null']
  %s0 = inlined_call_operand.vmem [shape: f32[2,8,64], index: 0, kind: input, shape index: {}]
  %s1 = inlined_call_operand.vmem [shape: f32[2,8,7], index: 1, kind: input, shape index: {}]
  %s2 = inlined_call_operand.hbm [shape: f32[2,8,9], index: 2, kind: input, shape index: {}]
  %s3 = inlined_call_operand.hbm [shape: f32[2,8,64], index: 3, kind: output, shape index: {0}]
  %s4 = inlined_call_operand.vmem [shape: f32[2,8,7], index: 4, kind: output, shape index: {1}]
  %s5 = inlined_call_operand.hbm [shape: f32[2,8,9], index: 5, kind: output, shape index: {2}]
  %6 = xla_tuple %s3, %s4, %s5
  %s7 = sld [smem:[#allocation0]]
  $region25: #{tpu_custom_call.1} parent=0
    _
  %s9 = ssub.s32 1, %s7
  %s10 = scalar_select 0, %s9, %s7
  // Predicated region
  $region2: #{tpu_custom_call.1} parent=0 // pred_check
    _
  $region3: #{tpu_custom_call.1} parent=0 // pred_check_branch
    %12 = sbr.rel target = $region5
  $region4: #{tpu_custom_call.1} parent=0 // pred_region
    %13 = sst [smem:[#allocation5]] [#allocation4]
    %14 = sst [smem:[#allocation6]] [#allocation3]
  $region5: #{tpu_custom_call.1} parent=0 // pred_fallthru
    _
  %16 = shalt.err (0)
  %s18 = sshll.u32 %s0, 4
  %s19 = int_to_ptr.vmem [resolvable:$true] %s18
  %s20 = sshll.u32 %s3, 4
  %s21 = int_to_ptr.hbm [resolvable:$true] %s20
  %23 = dma.vmem_to_hbm [thread:$0]  %s19, 256, %s21, [#allocation2]
  %s24 = scalar_lea.sflag [#allocation2], 1
  // Predicated region
  $region6: #{tpu_custom_call.1} parent=0 // pred_check
    _
  $region7: #{tpu_custom_call.1} parent=0 // pred_check_branch
    %26 = sbr.rel (0) target = $region9
  $region8: #{tpu_custom_call.1} parent=0 // pred_region
    loop: start=0, step=1, limit=1
    $region10: #{tpu_custom_call.1} parent=8 // loop_pre_header
      _
    $region11: #{tpu_custom_call.1} parent=8 // loop_header
      %s28 = sphi 0, %s32
      %p29 = scmp.ge.s32.totalorder %s28, 1
      %s33 = sphi %s1, %s1
      %s34 = sphi %s4, %s4
    $region12: #{tpu_custom_call.1} parent=8 // loop_header_branch
      %31 = sbr.rel (%p29) target = $region16
    $region13: #{tpu_custom_call.1} parent=8 // loop_body
      %v35 = vld [vmem:[%s33] sm:$0xff]
      %36 = vst [vmem:[%s34] sm:$0xff] %v35
      %v37 = vld [vmem:[%s33 + $0x8] sm:$0xff]
      %38 = vst [vmem:[%s34 + $0x8] sm:$0xff] %v37
    $region14: #{tpu_custom_call.1} parent=8 // loop_footer
      %s32 = sadd.s32 1, %s28
    $region15: #{tpu_custom_call.1} parent=8 // loop_footer_branch
      %27 = sbr.rel target = $region11
    $region16: #{tpu_custom_call.1} parent=8 // loop_exit
      _
  $region9: #{tpu_custom_call.1} parent=0 // pred_fallthru
    _
  // Predicated region
  $region17: #{tpu_custom_call.1} parent=0 // pred_check
    _
  $region18: #{tpu_custom_call.1} parent=0 // pred_check_branch
    %40 = sbr.rel target = $region20
  $region19: #{tpu_custom_call.1} parent=0 // pred_region
    _
  $region20: #{tpu_custom_call.1} parent=0 // pred_fallthru
    _
  // Predicated region
  $region21: #{tpu_custom_call.1} parent=0 // pred_check
    _
  $region22: #{tpu_custom_call.1} parent=0 // pred_check_branch
    %43 = sbr.rel (0) target = $region24
  $region23: #{tpu_custom_call.1} parent=0 // pred_region
    %44 = vsyncadd %s24, 256
  $region24: #{tpu_custom_call.1} parent=0 // pred_fallthru
    _
  %s45 = scalar_lea.sflag [#allocation2], 2
  %s47 = sshll.u32 1, 14
  %s48 = sxor.u32 4294967295, %s47
  %s50 = sshll.u32 %s2, 4
  %s51 = int_to_ptr.hbm [resolvable:$true] %s50
  %s52 = sshll.u32 %s5, 4
  %s53 = int_to_ptr.hbm [resolvable:$true] %s52
  %56 = dma.general %s51, 256, %s53, %s45, [#allocation8], [#allocation9], 0, 0
  %s57 = smul.u32 2, 8
  %s58 = smul.u32 %s57, 1
  %s59 = sshll.u32 %s58, 4
  %60 = dma.done [#allocation2], %s59
  %s61 = sshll.u32 %s58, 4
  %62 = dma.done %s24, %s61
  %s63 = sshll.u32 %s58, 4
  %64 = dma.done %s45, %s63
  %65 = vsyncmov [#allocation2]
  %s66 = vpop.sfrf %65
  %p67 = scmp.eq.s32.totalorder %s66, 0
  %p68 = pneg %p67
  %70 = shalt.err (%p68)
  %s71 = scalar_lea.sflag [#allocation2], 1
  %72 = vsyncmov %s71
  %s73 = vpop.sfrf %72
  %p74 = scmp.eq.s32.totalorder %s73, 0
  %p75 = pneg %p74
  %77 = shalt.err (%p75)
  %s78 = scalar_lea.sflag [#allocation2], 2
  %79 = vsyncmov %s78
  %s80 = vpop.sfrf %79
  %p81 = scmp.eq.s32.totalorder %s80, 0
  %p82 = pneg %p81
  %84 = shalt.err (%p82)

</llo_original>
